<compile_context>
chip_gen: v7x
topology: tpu7x:2x2x1
jax: 0.10.0
libtpu: 0.0.40
codegen_flags: <defaults>
</compile_context>

<pallas_src>
import functools
import math

import jax
import jax.numpy as jnp
from jax.experimental import pallas as pl
from jax.experimental.pallas import tpu as pltpu


COMPUTE_DTYPE = jnp.bfloat16     # MXU operand dtype (f32 accumulation)
ROW_TILE = 256                   # row tile for the (B*S, E) slab kernels
_EPS = 1e-5


def _cparams():
    return pltpu.CompilerParams(
        dimension_semantics=("parallel",),
        vmem_limit_bytes=32 * 1024 * 1024,
    )


def _row_grid(n):
    """Row tile + grid size for a (n, d) slab. Tile is either the full n or ROW_TILE."""
    tile = n if n <= ROW_TILE else ROW_TILE
    return tile, pl.cdiv(n, tile)


# -----------------------------------------------------------------------------
# Kernel 1: embedding LayerNorm, fused with positional add and pad-mask multiply
# -----------------------------------------------------------------------------
def _embed_ln_kernel(emb_ref, pos_ref, keep_ref, g_ref, b_ref, o_ref, *, eps):
    x = emb_ref[...].astype(jnp.float32) + pos_ref[...].astype(jnp.float32)
    mean = jnp.mean(x, axis=-1, keepdims=True)
    var = jnp.mean(jnp.square(x - mean), axis=-1, keepdims=True)
    y = (x - mean) * jax.lax.rsqrt(var + eps)
    y = y * g_ref[...].astype(jnp.float32) + b_ref[...].astype(jnp.float32)
    o_ref[...] = (y * keep_ref[...].astype(jnp.float32)).astype(o_ref.dtype)


def embed_layernorm(emb2d, pos2d, keep2d, gamma, beta, eps=_EPS):
    n, d = emb2d.shape
    tile, grid = _row_grid(n)
    return pl.pallas_call(
        functools.partial(_embed_ln_kernel, eps=eps),
        out_shape=jax.ShapeDtypeStruct((n, d), emb2d.dtype),
        grid=(grid,),
        in_specs=[
            pl.BlockSpec((tile, d), lambda i: (i, 0)),
            pl.BlockSpec((tile, d), lambda i: (i, 0)),
            pl.BlockSpec((tile, 1), lambda i: (i, 0)),
            pl.BlockSpec((1, d), lambda i: (0, 0)),
            pl.BlockSpec((1, d), lambda i: (0, 0)),
        ],
        out_specs=pl.BlockSpec((tile, d), lambda i: (i, 0)),
        compiler_params=_cparams(),
    )(emb2d, pos2d, keep2d, gamma.reshape(1, d), beta.reshape(1, d))


# -----------------------------------------------------------------------------
# Kernel 2: fused multi-head self-attention block (QKV proj + attn + out-proj +
#           residual + LayerNorm1).  One grid step per batch element.
# -----------------------------------------------------------------------------
def _mha_block_kernel(x_ref, wq_ref, wk_ref, wv_ref, bq_ref, bk_ref, bv_ref,
                      wo_ref, bo_ref, mask_ref, g_ref, beta_ref, o_ref,
                      *, nhead, head_dim, eps, compute_dtype):
    x = x_ref[0].astype(jnp.float32)           # (S, E)
    xc = x.astype(compute_dtype)
    mask = mask_ref[0]                          # (1, S) additive key-padding mask
    scale = 1.0 / math.sqrt(head_dim)

    # residual + out-proj bias; per-head contributions accumulate into y
    y = x + bo_ref[...].astype(jnp.float32)     # (S, E)

    for h in range(nhead):                      # static unroll (H is small)
        q = jnp.dot(xc, wq_ref[h].astype(compute_dtype),
                    preferred_element_type=jnp.float32) + bq_ref[h].astype(jnp.float32)
        k = jnp.dot(xc, wk_ref[h].astype(compute_dtype),
                    preferred_element_type=jnp.float32) + bk_ref[h].astype(jnp.float32)
        v = jnp.dot(xc, wv_ref[h].astype(compute_dtype),
                    preferred_element_type=jnp.float32) + bv_ref[h].astype(jnp.float32)

        # scores = q @ k^T without an explicit transpose (contract last dims)
        s = jax.lax.dot_general(
            q.astype(compute_dtype), k.astype(compute_dtype),
            dimension_numbers=(((1,), (1,)), ((), ())),
            preferred_element_type=jnp.float32) * scale          # (S, S)
        s = s + mask
        s = s - jnp.max(s, axis=-1, keepdims=True)
        p = jnp.exp(s)
        p = p * pl.reciprocal(jnp.sum(p, axis=-1, keepdims=True), approx=True)

        ctx = jnp.dot(p.astype(compute_dtype), v.astype(compute_dtype),
                      preferred_element_type=jnp.float32)        # (S, Dh)
        y = y + jnp.dot(ctx.astype(compute_dtype), wo_ref[h].astype(compute_dtype),
                        preferred_element_type=jnp.float32)      # (S, E)

    # LayerNorm1(residual + attention)
    mean = jnp.mean(y, axis=-1, keepdims=True)
    var = jnp.mean(jnp.square(y - mean), axis=-1, keepdims=True)
    out = (y - mean) * jax.lax.rsqrt(var + eps)
    o_ref[0] = (out * g_ref[...].astype(jnp.float32)
                + beta_ref[...].astype(jnp.float32)).astype(o_ref.dtype)


def mha_block(x_bse, add_mask_b1s, p, nhead, eps=_EPS):
    B, S, E = x_bse.shape
    Dh = E // nhead
    kernel = functools.partial(_mha_block_kernel, nhead=nhead, head_dim=Dh,
                               eps=eps, compute_dtype=COMPUTE_DTYPE)
    return pl.pallas_call(
        kernel,
        out_shape=jax.ShapeDtypeStruct((B, S, E), x_bse.dtype),
        grid=(B,),
        in_specs=[
            pl.BlockSpec((1, S, E), lambda b: (b, 0, 0)),        # x
            pl.BlockSpec((nhead, E, Dh), lambda b: (0, 0, 0)),   # wq  (resident)
            pl.BlockSpec((nhead, E, Dh), lambda b: (0, 0, 0)),   # wk
            pl.BlockSpec((nhead, E, Dh), lambda b: (0, 0, 0)),   # wv
            pl.BlockSpec((nhead, 1, Dh), lambda b: (0, 0, 0)),   # bq
            pl.BlockSpec((nhead, 1, Dh), lambda b: (0, 0, 0)),   # bk
            pl.BlockSpec((nhead, 1, Dh), lambda b: (0, 0, 0)),   # bv
            pl.BlockSpec((nhead, Dh, E), lambda b: (0, 0, 0)),   # wo
            pl.BlockSpec((1, E), lambda b: (0, 0)),              # bo
            pl.BlockSpec((1, 1, S), lambda b: (b, 0, 0)),        # additive mask
            pl.BlockSpec((1, E), lambda b: (0, 0)),              # ln1 gamma
            pl.BlockSpec((1, E), lambda b: (0, 0)),              # ln1 beta
        ],
        out_specs=pl.BlockSpec((1, S, E), lambda b: (b, 0, 0)),
        compiler_params=_cparams(),
    )(x_bse, p["wq_h"], p["wk_h"], p["wv_h"], p["bq_h"], p["bk_h"], p["bv_h"],
      p["wo_h"], p["bo"].reshape(1, E), add_mask_b1s,
      p["ln1_g"].reshape(1, E), p["ln1_b"].reshape(1, E))


# -----------------------------------------------------------------------------
# Kernel 3: fused feed-forward block (lin1 + relu + lin2 + residual + LayerNorm2)
#           The (rows, FFN) hidden stays on-chip; rows are tiled and "parallel".
# -----------------------------------------------------------------------------
def _ffn_ln_kernel(x_ref, w1_ref, b1_ref, w2_ref, b2_ref, g_ref, b_ref, o_ref,
                   *, eps, compute_dtype):
    x = x_ref[...].astype(jnp.float32)                           # (rows, E)
    xc = x.astype(compute_dtype)
    h = jnp.dot(xc, w1_ref[...].astype(compute_dtype),
                preferred_element_type=jnp.float32)
    h = jnp.maximum(h + b1_ref[...].astype(jnp.float32), 0.0)    # (rows, FFN) in VMEM only
    y = jnp.dot(h.astype(compute_dtype), w2_ref[...].astype(compute_dtype),
                preferred_element_type=jnp.float32)
    y = y + b2_ref[...].astype(jnp.float32) + x                  # residual fused
    mean = jnp.mean(y, axis=-1, keepdims=True)
    var = jnp.mean(jnp.square(y - mean), axis=-1, keepdims=True)
    out = (y - mean) * jax.lax.rsqrt(var + eps)
    o_ref[...] = (out * g_ref[...].astype(jnp.float32)
                  + b_ref[...].astype(jnp.float32)).astype(o_ref.dtype)


def ffn_layernorm(x2d, w1, b1, w2, b2, gamma, beta, eps=_EPS):
    n, d = x2d.shape
    f = w1.shape[1]
    tile, grid = _row_grid(n)
    return pl.pallas_call(
        functools.partial(_ffn_ln_kernel, eps=eps, compute_dtype=COMPUTE_DTYPE),
        out_shape=jax.ShapeDtypeStruct((n, d), x2d.dtype),
        grid=(grid,),
        in_specs=[
            pl.BlockSpec((tile, d), lambda i: (i, 0)),
            pl.BlockSpec((d, f), lambda i: (0, 0)),
            pl.BlockSpec((1, f), lambda i: (0, 0)),
            pl.BlockSpec((f, d), lambda i: (0, 0)),
            pl.BlockSpec((1, d), lambda i: (0, 0)),
            pl.BlockSpec((1, d), lambda i: (0, 0)),
            pl.BlockSpec((1, d), lambda i: (0, 0)),
        ],
        out_specs=pl.BlockSpec((tile, d), lambda i: (i, 0)),
        compiler_params=_cparams(),
    )(x2d, w1, b1.reshape(1, f), w2, b2.reshape(1, d),
      gamma.reshape(1, d), beta.reshape(1, d))


# -----------------------------------------------------------------------------
# Glue (plain JAX): embedding gather, positions, per-head weight re-layout
# -----------------------------------------------------------------------------
def sinusoidal_pos_table(num_embeddings, dim, padding_idx):
    # fairseq SinusoidalPositionalEmbedding.get_embedding
    half_dim = dim // 2
    emb = math.log(10000.0) / (half_dim - 1)
    emb = jnp.exp(jnp.arange(half_dim, dtype=jnp.float32) * -emb)
    emb = jnp.arange(num_embeddings, dtype=jnp.float32)[:, None] * emb[None, :]
    emb = jnp.concatenate([jnp.sin(emb), jnp.cos(emb)], axis=1)
    if dim % 2 == 1:
        emb = jnp.concatenate([emb, jnp.zeros((num_embeddings, 1), jnp.float32)], 1)
    emb = emb.at[padding_idx].set(0.0)
    return emb


def make_positions(tokens, padding_idx):
    # fairseq utils.make_positions: non-pad tokens get padding_idx+1, +2, ...
    mask = (tokens != padding_idx).astype(jnp.int32)
    return jnp.cumsum(mask, axis=1) * mask + padding_idx


def _split_attention_params(lp, nhead):
    """Re-layout attention weights per head so the kernel only indexes the leading axis."""
    E = lp["out_proj_w"].shape[0]
    Dh = E // nhead
    w, b = lp["in_proj_w"], lp["in_proj_b"]          # (E, 3E), (3E,)
    wq, wk, wv = w[:, :E], w[:, E:2 * E], w[:, 2 * E:]
    bq, bk, bv = b[:E], b[E:2 * E], b[2 * E:]

    def per_head_w(wm):                              # (E, E) -> (H, E, Dh)
        return wm.reshape(E, nhead, Dh).transpose(1, 0, 2)

    return {
        "wq_h": per_head_w(wq), "wk_h": per_head_w(wk), "wv_h": per_head_w(wv),
        "bq_h": bq.reshape(nhead, 1, Dh),
        "bk_h": bk.reshape(nhead, 1, Dh),
        "bv_h": bv.reshape(nhead, 1, Dh),
        "wo_h": lp["out_proj_w"].reshape(nhead, Dh, E),
        "bo": lp["out_proj_b"],
        "ln1_g": lp["ln1_g"], "ln1_b": lp["ln1_b"],
    }


def transformer_encoder_forward(src_tokens, params):
    B, S = src_tokens.shape
    E = params["embed_tokens"].shape[1]
    H = params["nhead"]
    pad = params["padding_idx"]

    encoder_padding_mask = (src_tokens == pad)                        # (B, S) bool

    # forward_embedding
    # TODO(synk): embedding-table gather stays in plain JAX (would need a manual DMA gather kernel).
    tok_emb = jnp.take(params["embed_tokens"], src_tokens, axis=0)    # (B, S, E)
    encoder_embedding = math.sqrt(E) * tok_emb
    positions = make_positions(src_tokens, pad)
    pos_emb = jnp.take(params["pos_table"], positions, axis=0)

    keep = (1.0 - encoder_padding_mask.astype(jnp.float32)).reshape(B * S, 1)
    x2d = embed_layernorm(encoder_embedding.reshape(B * S, E),
                          pos_emb.reshape(B * S, E),
                          keep, params["emb_ln_g"], params["emb_ln_b"])
    # dropout_module: eval mode -> identity; has_pads multiply fused into the kernel above.

    add_mask = jnp.where(encoder_padding_mask,
                         jnp.float32(-1e9), jnp.float32(0.0)).reshape(B, 1, S)

    attn_params = [_split_attention_params(lp, H) for lp in params["layers"]]

    x = x2d.reshape(B, S, E)                                          # batch-major internal layout
    for lp, ap in zip(params["layers"], attn_params):
        x = mha_block(x, add_mask, ap, H)                             # LN1 fused
        x = ffn_layernorm(x.reshape(B * S, E),
                          lp["lin1_w"], lp["lin1_b"],
                          lp["lin2_w"], lp["lin2_b"],
                          lp["ln2_g"], lp["ln2_b"]).reshape(B, S, E)  # LN2 fused

    x_sbe = jnp.transpose(x, (1, 0, 2))                               # (S, B, E) fairseq convention
    # encoder_normalize_before=False -> no final layer_norm
    return {
        "encoder_out": [x_sbe],
        "encoder_padding_mask": [encoder_padding_mask],
        "encoder_embedding": [encoder_embedding],
        "encoder_states": [],
        "src_tokens": [],
        "src_lengths": [],
    }


# -----------------------------------------------------------------------------
# Deterministic parameter init (shapes from the module's __init__)
# -----------------------------------------------------------------------------
def init_params(key, vocab, E, nhead, num_layers, ffn, pad_idx, max_pos=1024):
    keys = jax.random.split(key, 1 + num_layers)
    embed_tokens = 0.1 * jax.random.normal(keys[0], (vocab, E), jnp.float32)
    embed_tokens = embed_tokens.at[pad_idx].set(0.0)

    layers = []
    for i in range(num_layers):
        lk = jax.random.split(keys[1 + i], 8)
        layers.append({
            # stored already transposed so kernels compute x @ W + b
            "in_proj_w": 0.05 * jax.random.normal(lk[0], (E, 3 * E), jnp.float32),
            "in_proj_b": 0.01 * jax.random.normal(lk[1], (3 * E,), jnp.float32),
            "out_proj_w": 0.05 * jax.random.normal(lk[2], (E, E), jnp.float32),
            "out_proj_b": 0.01 * jax.random.normal(lk[3], (E,), jnp.float32),
            "lin1_w": 0.05 * jax.random.normal(lk[4], (E, ffn), jnp.float32),
            "lin1_b": 0.01 * jax.random.normal(lk[5], (ffn,), jnp.float32),
            "lin2_w": 0.05 * jax.random.normal(lk[6], (ffn, E), jnp.float32),
            "lin2_b": 0.01 * jax.random.normal(lk[7], (E,), jnp.float32),
            "ln1_g": jnp.ones((E,), jnp.float32),
            "ln1_b": jnp.zeros((E,), jnp.float32),
            "ln2_g": jnp.ones((E,), jnp.float32),
            "ln2_b": jnp.zeros((E,), jnp.float32),
        })

    return {
        "embed_tokens": embed_tokens,
        "pos_table": sinusoidal_pos_table(max_pos + pad_idx + 1, E, pad_idx),
        "emb_ln_g": jnp.ones((E,), jnp.float32),
        "emb_ln_b": jnp.zeros((E,), jnp.float32),
        "layers": layers,
        "nhead": nhead,
        "padding_idx": pad_idx,
    }


# -----------------------------------------------------------------------------
if __name__ == "__main__":
    VOCAB, EMBED, NHEAD, NLAYERS, FFN, PAD = 16, 32, 4, 2, 1024, 1
    BATCH, SEQ = 2, 8

    params = init_params(jax.random.PRNGKey(0), VOCAB, EMBED, NHEAD,
                         NLAYERS, FFN, PAD)

    # deterministic example tokens (second sentence right-padded with <pad>=1)
    src_tokens = jnp.array(
        [[4, 5, 6, 7, 8, 9, 10, 11],
         [3, 4, 5, 6, 7, PAD, PAD, PAD]], dtype=jnp.int32)

    out = transformer_encoder_forward(src_tokens, params)
    jax.block_until_ready(out["encoder_out"][0])

    assert out["encoder_out"][0].shape == (SEQ, BATCH, EMBED)
    assert out["encoder_padding_mask"][0].shape == (BATCH, SEQ)
    assert out["encoder_embedding"][0].shape == (BATCH, SEQ, EMBED)
    assert bool(jnp.all(jnp.isfinite(out["encoder_out"][0])))
    print("KERNEL_OK")
</pallas_src>

<mosaic_0001>
module attributes {stable_mosaic.version = 11 : i64} {
  func.func @_embed_ln_kernel(%arg0: i32, %arg1: memref<16x32xf32, #tpu.memory_space<vmem>>, %arg2: memref<16x32xf32, #tpu.memory_space<vmem>>, %arg3: memref<16x1xf32, #tpu.memory_space<vmem>>, %arg4: memref<1x32xf32, #tpu.memory_space<vmem>>, %arg5: memref<1x32xf32, #tpu.memory_space<vmem>>, %arg6: memref<16x32xf32, #tpu.memory_space<vmem>>) attributes {dimension_semantics = [#tpu.dimension_semantics<parallel>], iteration_bounds = array<i64: 1>, scalar_prefetch = 0 : i64, scratch_operands = 0 : i64, tpu.core_type = #tpu.core_type<tc>, window_params = [{transform_indices = @transform_0, window_bounds = array<i64: 16, 32>}, {transform_indices = @transform_1, window_bounds = array<i64: 16, 32>}, {transform_indices = @transform_2, window_bounds = array<i64: 16, 1>}, {pipeline_mode = #tpu.pipeline_mode<synchronous>, transform_indices = @transform_3, window_bounds = array<i64: 1, 32>}, {pipeline_mode = #tpu.pipeline_mode<synchronous>, transform_indices = @transform_4, window_bounds = array<i64: 1, 32>}, {transform_indices = @transform_5, window_bounds = array<i64: 16, 32>}]} {
    %c0 = arith.constant 0 : index
    %c0_0 = arith.constant 0 : index
    %0 = vector.load %arg1[%c0, %c0_0] : memref<16x32xf32, #tpu.memory_space<vmem>>, vector<16x32xf32>
    %c0_1 = arith.constant 0 : index
    %c0_2 = arith.constant 0 : index
    %1 = vector.load %arg2[%c0_1, %c0_2] : memref<16x32xf32, #tpu.memory_space<vmem>>, vector<16x32xf32>
    %2 = arith.addf %0, %1 : vector<16x32xf32>
    %cst = arith.constant dense<0.000000e+00> : vector<16xf32>
    %3 = vector.multi_reduction <add>, %2, %cst [1] : vector<16x32xf32> to vector<16xf32>
    %4 = vector.shape_cast %3 : vector<16xf32> to vector<16x1xf32>
    %cst_3 = arith.constant 3.200000e+01 : f32
    %5 = vector.broadcast %cst_3 : f32 to vector<16x1xf32>
    %6 = arith.divf %4, %5 : vector<16x1xf32>
    %7 = vector.broadcast %6 : vector<16x1xf32> to vector<16x32xf32>
    %8 = arith.subf %2, %7 : vector<16x32xf32>
    %9 = arith.mulf %8, %8 : vector<16x32xf32>
    %cst_4 = arith.constant dense<0.000000e+00> : vector<16xf32>
    %10 = vector.multi_reduction <add>, %9, %cst_4 [1] : vector<16x32xf32> to vector<16xf32>
    %11 = vector.shape_cast %10 : vector<16xf32> to vector<16x1xf32>
    %cst_5 = arith.constant 3.200000e+01 : f32
    %12 = vector.broadcast %cst_5 : f32 to vector<16x1xf32>
    %13 = arith.divf %11, %12 : vector<16x1xf32>
    %14 = vector.broadcast %6 : vector<16x1xf32> to vector<16x32xf32>
    %15 = arith.subf %2, %14 : vector<16x32xf32>
    %cst_6 = arith.constant 9.99999974E-6 : f32
    %16 = vector.broadcast %cst_6 : f32 to vector<16x1xf32>
    %17 = arith.addf %13, %16 : vector<16x1xf32>
    %18 = math.rsqrt %17 : vector<16x1xf32>
    %19 = vector.broadcast %18 : vector<16x1xf32> to vector<16x32xf32>
    %20 = arith.mulf %15, %19 : vector<16x32xf32>
    %c0_7 = arith.constant 0 : index
    %c0_8 = arith.constant 0 : index
    %21 = vector.load %arg4[%c0_7, %c0_8] : memref<1x32xf32, #tpu.memory_space<vmem>>, vector<1x32xf32>
    %22 = vector.broadcast %21 : vector<1x32xf32> to vector<16x32xf32>
    %23 = arith.mulf %20, %22 : vector<16x32xf32>
    %c0_9 = arith.constant 0 : index
    %c0_10 = arith.constant 0 : index
    %24 = vector.load %arg5[%c0_9, %c0_10] : memref<1x32xf32, #tpu.memory_space<vmem>>, vector<1x32xf32>
    %25 = vector.broadcast %24 : vector<1x32xf32> to vector<16x32xf32>
    %26 = arith.addf %23, %25 : vector<16x32xf32>
    %c0_11 = arith.constant 0 : index
    %c0_12 = arith.constant 0 : index
    %27 = vector.load %arg3[%c0_11, %c0_12] : memref<16x1xf32, #tpu.memory_space<vmem>>, vector<16x1xf32>
    %28 = vector.broadcast %27 : vector<16x1xf32> to vector<16x32xf32>
    %29 = arith.mulf %26, %28 : vector<16x32xf32>
    %c0_13 = arith.constant 0 : index
    %c0_14 = arith.constant 0 : index
    %30 = vector.load %arg6[%c0_13, %c0_14] : memref<16x32xf32, #tpu.memory_space<vmem>>, vector<16x32xf32>
    tpu.vector_store %arg6[%c0_13, %c0_14], %29 {strides = array<i32>} : memref<16x32xf32, #tpu.memory_space<vmem>>, vector<16x32xf32>,
    return
  }
  func.func @transform_0(%arg0: i32) -> (i32, i32) {
    %c0_i32 = arith.constant 0 : i32
    %c0_i32_0 = arith.constant 0 : i32
    return %arg0, %c0_i32 : i32, i32
  }
  func.func @transform_1(%arg0: i32) -> (i32, i32) {
    %c0_i32 = arith.constant 0 : i32
    %c0_i32_0 = arith.constant 0 : i32
    return %arg0, %c0_i32 : i32, i32
  }
  func.func @transform_2(%arg0: i32) -> (i32, i32) {
    %c0_i32 = arith.constant 0 : i32
    %c0_i32_0 = arith.constant 0 : i32
    return %arg0, %c0_i32 : i32, i32
  }
  func.func @transform_3(%arg0: i32) -> (i32, i32) {
    %c0_i32 = arith.constant 0 : i32
    %c0_i32_0 = arith.constant 0 : i32
    %c0_i32_1 = arith.constant 0 : i32
    return %c0_i32, %c0_i32_0 : i32, i32
  }
  func.func @transform_4(%arg0: i32) -> (i32, i32) {
    %c0_i32 = arith.constant 0 : i32
    %c0_i32_0 = arith.constant 0 : i32
    %c0_i32_1 = arith.constant 0 : i32
    return %c0_i32, %c0_i32_0 : i32, i32
  }
  func.func @transform_5(%arg0: i32) -> (i32, i32) {
    %c0_i32 = arith.constant 0 : i32
    %c0_i32_0 = arith.constant 0 : i32
    return %arg0, %c0_i32 : i32, i32
  }
}

</mosaic_0001>

<llo_original>
// kernel: tpu_custom_call.1
$region0: #{tpu_custom_call.1}
  #allocation0 [shape = 'u32[]', space=smem, size = 0x4, offset = 0x4, fixed_abs, tag = 'smem constant byte address 0x4 - core index']
  #allocation1 [shape = 'u32[144,128]{1,0:T(1,128)}', space=vmem, size = 0x12000, scoped, tag = 'internal scratch']
  %s0 = inlined_call_operand.vmem [shape: f32[16,32], index: 0, kind: input, shape index: {}]
  %s1 = inlined_call_operand.hbm [shape: f32[16,32], index: 1, kind: input, shape index: {}]
  %s2 = inlined_call_operand.vmem [shape: f32[16,1], index: 2, kind: input, shape index: {}]
  %s3 = inlined_call_operand.vmem [shape: f32[1,32], index: 3, kind: input, shape index: {}]
  %s4 = inlined_call_operand.vmem [shape: f32[1,32], index: 4, kind: input, shape index: {}]
  %s5 = inlined_call_operand.hbm [shape: f32[16,32], index: 5, kind: output, shape index: {}]
  %s6 = sld [smem:[#allocation0]]
  $region34: #{tpu_custom_call.1} parent=0
    _
  %s8 = ssub.s32 1, %s6
  %s9 = scalar_select 0, %s8, %s6
  $region1: #{tpu_custom_call.1} parent=0
    #allocation2 [shape = 'u8[8192]{0}', space=vmem, size = 0x2000, scoped, tag = 'input window, operand 1, single buffered']
    #allocation3 [shape = 's32[1]{0}', space=sflag, size = 0x4, scoped, tag = 'scoped memory for tpu_custom_call.1']
    #allocation4 [shape = 's32[1]{0}', space=sflag, size = 0x4, scoped, tag = 'scoped memory for tpu_custom_call.1']
    #allocation5 [shape = 'u8[8192]{0}', space=vmem, size = 0x2000, scoped, tag = 'output window, operand 0, single buffered']
    %10 = vsyncpa [#allocation3], 0
    %11 = vsyncpa [#allocation4], 0
    // Predicated region
    $region2: #{tpu_custom_call.1} parent=1 // pred_check
      _
    $region3: #{tpu_custom_call.1} parent=1 // pred_check_branch
      %13 = sbr.rel (0) target = $region5
    $region4: #{tpu_custom_call.1} parent=1 // pred_region
      _
    $region5: #{tpu_custom_call.1} parent=1 // pred_fallthru
      _
    // Predicated region
    $region6: #{tpu_custom_call.1} parent=1 // pred_check
      _
    $region7: #{tpu_custom_call.1} parent=1 // pred_check_branch
      %15 = sbr.rel (0) target = $region9
    $region8: #{tpu_custom_call.1} parent=1 // pred_region
      %s17 = ssub.s32 256, 256
      %18 = vsyncadd [#allocation3], %s17
      %s19 = sshll.u32 [#allocation2], 4
      %s20 = int_to_ptr.vmem [resolvable:$true] %s19
      %25 = dma.hbm_to_vmem [thread:$0]  %s1, 256, %s20, [#allocation3], 128, 128, 8
    $region9: #{tpu_custom_call.1} parent=1 // pred_fallthru
      _
    // Predicated region
    $region10: #{tpu_custom_call.1} parent=1 // pred_check
      _
    $region11: #{tpu_custom_call.1} parent=1 // pred_check_branch
      %27 = sbr.rel (0) target = $region13
    $region12: #{tpu_custom_call.1} parent=1 // pred_region
      _
    $region13: #{tpu_custom_call.1} parent=1 // pred_fallthru
      _
    // Predicated region
    $region14: #{tpu_custom_call.1} parent=1 // pred_check
      _
    $region15: #{tpu_custom_call.1} parent=1 // pred_check_branch
      %29 = sbr.rel (0) target = $region17
    $region16: #{tpu_custom_call.1} parent=1 // pred_region
      _
    $region17: #{tpu_custom_call.1} parent=1 // pred_fallthru
      _
    // Predicated region
    $region18: #{tpu_custom_call.1} parent=1 // pred_check
      _
    $region19: #{tpu_custom_call.1} parent=1 // pred_check_branch
      %31 = sbr.rel (0) target = $region21
    $region20: #{tpu_custom_call.1} parent=1 // pred_region
      _
    $region21: #{tpu_custom_call.1} parent=1 // pred_fallthru
      _
    // Predicated region
    $region22: #{tpu_custom_call.1} parent=1 // pred_check
      _
    $region23: #{tpu_custom_call.1} parent=1 // pred_check_branch
      %33 = sbr.rel (0) target = $region25
    $region24: #{tpu_custom_call.1} parent=1 // pred_region
      %34 = dma.done [#allocation3], 256
    $region25: #{tpu_custom_call.1} parent=1 // pred_fallthru
      _
    %v35 = vld [vmem:[%s0] sm:$0xff]
    %v36 = vld [vmem:[%s0 + $0x8] sm:$0xff]
    %v37 = vld [vmem:[#allocation2] sm:$0xff]
    %v38 = vld [vmem:[#allocation2 + $0x8] sm:$0xff]
    %v39 = vadd.f32 %v35, %v37
    %v40 = vadd.f32 %v36, %v38
    %vm41 = vcmask 261120
    %v42 = vsel %vm41, %v39, 0.0
    %43 = vadd.xlane.f32.xlu0 %v42
    %v44 = vpop.xlane.xlu0 %43
    %v45 = vsel %vm41, %v40, 0.0
    %46 = vadd.xlane.f32.xlu0 %v45
    %v47 = vpop.xlane.xlu0 %46
    %v48 = vrcp.pop 32.0
    %v49 = vmul.f32 %v44, %v48
    %v50 = vmul.f32 %v47, %v48
    %v51 = vsub.f32 %v39, %v49
    %v52 = vsub.f32 %v40, %v50
    %v53 = vmul.f32 %v51, %v51
    %v54 = vmul.f32 %v52, %v52
    %v55 = vsel %vm41, %v53, 0.0
    %56 = vadd.xlane.f32.xlu0 %v55
    %v57 = vpop.xlane.xlu0 %56
    %v58 = vsel %vm41, %v54, 0.0
    %59 = vadd.xlane.f32.xlu0 %v58
    %v60 = vpop.xlane.xlu0 %59
    %v61 = vmul.f32 %v57, %v48
    %v62 = vmul.f32 %v60, %v48
    %v63 = vadd.f32 %v61, 1e-05
    %v64 = vadd.f32 %v62, 1e-05
    %v65 = vrsqrt.pop %v63
    %v66 = vrsqrt.pop %v64
    %v67 = vmul.f32 %v51, %v65
    %v68 = vmul.f32 %v52, %v66
    %v69 = vld [vmem:[%s3] sm:$0x1]
    %v71 = vlaneseq
    %v72 = vshrl.u32 %v71, 7
    %v73 = vsub.s32 0, %v72
    %v74 = vrot.slane %v69, %v73
    %v76 = vmul.f32 %v67, %v74
    %v77 = vmul.f32 %v68, %v74
    %v78 = vld [vmem:[%s4] sm:$0x1]
    %v80 = vlaneseq
    %v81 = vshrl.u32 %v80, 7
    %v82 = vsub.s32 0, %v81
    %v83 = vrot.slane %v78, %v82
    %v85 = vadd.f32 %v76, %v83
    %v86 = vadd.f32 %v77, %v83
    %v87 = vld [vmem:[%s2] sm:$0xff]
    %v88 = vld [vmem:[%s2 + $0x8] sm:$0xff]
    %90 = vset.pattern.permute.xlu0 0
    %91 = vperm.xlu0 %90, %v87
    %v92 = vpop.permute.xlu0 %91
    %95 = vset.pattern.permute.xlu0 0
    %96 = vperm.xlu0 %95, %v88
    %v97 = vpop.permute.xlu0 %96
    %v99 = vmul.f32 %v85, %v92
    %v100 = vmul.f32 %v86, %v97
    %101 = vst.msk [vmem:[#allocation5] sm:$0xff] %vm41, %v99
    %102 = vst.msk [vmem:[#allocation5 + $0x8] sm:$0xff] %vm41, %v100
    // Predicated region
    $region26: #{tpu_custom_call.1} parent=1 // pred_check
      _
    $region27: #{tpu_custom_call.1} parent=1 // pred_check_branch
      %104 = sbr.rel (0) target = $region29
    $region28: #{tpu_custom_call.1} parent=1 // pred_region
      %s106 = ssub.s32 256, 256
      %107 = vsyncadd [#allocation4], %s106
      %s108 = sshll.u32 [#allocation5], 4
      %s109 = int_to_ptr.vmem [resolvable:$true] %s108
      %114 = dma.vmem_to_hbm [thread:$0]  %s109, 256, %s5, [#allocation4], 128, 128, 8
    $region29: #{tpu_custom_call.1} parent=1 // pred_fallthru
      _
    // Predicated region
    $region30: #{tpu_custom_call.1} parent=1 // pred_check
      _
    $region31: #{tpu_custom_call.1} parent=1 // pred_check_branch
      %116 = sbr.rel (0) target = $region33
    $region32: #{tpu_custom_call.1} parent=1 // pred_region
      %117 = dma.done [#allocation4], 256
    $region33: #{tpu_custom_call.1} parent=1 // pred_fallthru
      _
    %118 = vsyncpa [#allocation3], 1
    %119 = vsyncpa [#allocation4], 1

</llo_original>
